<compile_context>
chip_gen: v5e
topology: v5e:2x2
jax: 0.10.0
libtpu: 0.0.40
codegen_flags: <defaults>
</compile_context>

<pallas_src>
import math

import jax
import jax.numpy as jnp
from jax.experimental import pallas as pl
from jax.experimental.pallas import tpu as pltpu


def _build_pe(d_model: int, max_len: int = 5000) -> jnp.ndarray:
    """Sinusoidal positional-encoding buffer, shape [max_len, 1, d_model], float32."""
    position = jnp.arange(max_len, dtype=jnp.float32)[:, None]                 # [max_len, 1]
    div_term = jnp.exp(
        jnp.arange(0, d_model, 2, dtype=jnp.float32) * (-math.log(10000.0) / d_model)
    )                                                                           # [d_model/2]
    pe = jnp.zeros((max_len, d_model), dtype=jnp.float32)
    pe = pe.at[:, 0::2].set(jnp.sin(position * div_term))
    pe = pe.at[:, 1::2].set(jnp.cos(position * div_term))
    return pe[:, None, :]                                                       # [max_len, 1, d_model]


def _pe_kernel(x_ref, pe_ref, mask_ref, o_ref):
    # x_ref:    (TS, B, D)  native layout, D lane-dense
    # pe_ref:   (TS, 1, D)  float32, broadcast over batch (sublane broadcast)
    # mask_ref: (TS, B, 1)  broadcast over d_model (lane broadcast)
    x = x_ref[...].astype(jnp.float32)
    pe = pe_ref[...]
    m = mask_ref[...].astype(jnp.float32)
    o_ref[...] = (x + pe * m).astype(o_ref.dtype)


def _round_up(n: int, q: int) -> int:
    return -(-n // q) * q


def _sublane_quantum(dtype) -> int:
    # f32 -> 8, bf16 -> 16, int8/fp8 -> 32 (sub-32-bit dtypes pack along sublanes)
    return max(8, 32 // jnp.dtype(dtype).itemsize)


def _padded_vmem_bytes(seq_tile: int, B: int, D: int,
                       x_bytes: int, mask_bytes: int, sub: int) -> int:
    """Double-buffered VMEM footprint of one grid step with (sublane, lane) padding."""
    b_pad = _round_up(B, sub)
    d_pad = _round_up(D, 128)
    x_blk = seq_tile * b_pad * d_pad * x_bytes          # x block (out block is the same)
    pe_blk = seq_tile * 8 * d_pad * 4                   # (TS, 1, D) f32, 1 -> 8 sublanes
    m_blk = seq_tile * b_pad * 128 * mask_bytes         # (TS, B, 1), 1 -> 128 lanes
    return 2 * (2 * x_blk + pe_blk + m_blk)             # Buffered(2) pipeline


def _pick_seq_tile(S: int, B: int, D: int, dtype, mask_bytes: int,
                   target_block_bytes: int, vmem_budget_bytes: int) -> int:
    sub = _sublane_quantum(dtype)
    eb = jnp.dtype(dtype).itemsize
    row_bytes = max(1, B * D * eb)                       # logical HBM bytes per seq row of x

    t = max(sub, (target_block_bytes // row_bytes) // sub * sub)
    t = min(t, _round_up(S, sub))                        # never bigger than (rounded) S

    # keep >= 4 grid steps when S allows (v7x shards the grid across 2 TensorCores)
    if S >= 4 * sub:
        t = min(t, max(sub, (S // (4 * sub)) * sub))

    # shrink until the padded, double-buffered footprint fits the VMEM budget
    while t > sub and _padded_vmem_bytes(t, B, D, eb, mask_bytes, sub) > vmem_budget_bytes:
        t = max(sub, (t // 2) // sub * sub)
    return int(t)


def positional_encoding(x: jnp.ndarray, using_mask: jnp.ndarray, pe: jnp.ndarray,
                        *, seq_tile: int | None = None,
                        target_block_bytes: int = 4 << 20,
                        vmem_budget_bytes: int = 24 << 20) -> jnp.ndarray:
    """x: [S, B, D], using_mask: [S, B, 1], pe: [max_len, 1, D] -> [S, B, D] (x.dtype)."""
    S, B, D = x.shape
    max_len = pe.shape[0]
    assert pe.shape == (max_len, 1, D), "pe must be [max_len, 1, d_model]"
    assert max_len >= S, "pe buffer shorter than sequence length"
    assert using_mask.shape == (S, B, 1), "using_mask must be [S, B, 1]"

    dtype = x.dtype
    x_bytes = jnp.dtype(dtype).itemsize
    pe = pe.astype(jnp.float32)                          # fp32 buffer; compute in f32
    if using_mask.dtype == jnp.bool_:
        using_mask = using_mask.astype(jnp.float32)
    mask_bytes = jnp.dtype(using_mask.dtype).itemsize

    if seq_tile is None:
        seq_tile = _pick_seq_tile(S, B, D, dtype, mask_bytes,
                                  target_block_bytes, vmem_budget_bytes)
    grid = (pl.cdiv(S, seq_tile),)                       # uneven tail handled by masked writes

    sub = _sublane_quantum(dtype)
    footprint = _padded_vmem_bytes(seq_tile, B, D, x_bytes, mask_bytes, sub)
    vmem_limit = int(min(32 << 20, max(16 << 20, footprint + (4 << 20))))

    cost = pl.CostEstimate(
        flops=2 * S * B * D,
        transcendentals=0,
        bytes_accessed=2 * S * B * D * x_bytes + S * D * 4 + S * B * mask_bytes,
    )

    return pl.pallas_call(
        _pe_kernel,
        out_shape=jax.ShapeDtypeStruct((S, B, D), dtype),
        grid_spec=pltpu.PrefetchScalarGridSpec(
            num_scalar_prefetch=0,
            grid=grid,
            in_specs=[
                pl.BlockSpec((seq_tile, B, D), lambda i: (i, 0, 0)),   # x (native layout)
                pl.BlockSpec((seq_tile, 1, D), lambda i: (i, 0, 0)),   # pe (rows selected here)
                pl.BlockSpec((seq_tile, B, 1), lambda i: (i, 0, 0)),   # using_mask
            ],
            out_specs=pl.BlockSpec((seq_tile, B, D), lambda i: (i, 0, 0)),
        ),
        compiler_params=pltpu.CompilerParams(
            dimension_semantics=("parallel",),           # shards seq grid across TCs on v7x
            vmem_limit_bytes=vmem_limit,
        ),
        cost_estimate=cost,
        input_output_aliases={0: 0},                     # donate x into the output buffer
    )(x, pe, using_mask)


if __name__ == "__main__":
    key = jax.random.PRNGKey(0)
    B, D = 2, 128            # batch, d_model (lane-dense d_model)
    MAX_LEN = 64             # buffer max_len (module default is 5000; kept small here)
    pe = _build_pe(D, MAX_LEN)

    k1, k2, k3, k4 = jax.random.split(key, 4)

    # Case 1: tile-aligned sequence length.
    S1 = 16
    x1 = jax.random.normal(k1, (S1, B, D), dtype=jnp.float32)
    m1 = (jax.random.uniform(k2, (S1, B, 1)) > 0.5).astype(jnp.float32)
    ref1 = x1 + pe[:S1] * m1                             # reference before the aliased call
    out1 = jax.block_until_ready(positional_encoding(x1, m1, pe))
    assert out1.shape == (S1, B, D)
    assert jnp.allclose(out1, ref1, atol=1e-6, rtol=1e-6)

    # Case 2: non-divisible S (masked tail block) with a multi-step grid.
    S2 = 37
    x2 = jax.random.normal(k3, (S2, B, D), dtype=jnp.float32)
    m2 = (jax.random.uniform(k4, (S2, B, 1)) > 0.5).astype(jnp.float32)
    ref2 = x2 + pe[:S2] * m2
    out2 = jax.block_until_ready(positional_encoding(x2, m2, pe))
    assert out2.shape == (S2, B, D)
    assert jnp.allclose(out2, ref2, atol=1e-6, rtol=1e-6)

    print("KERNEL_OK")
</pallas_src>

<mosaic_0001>
module attributes {stable_mosaic.version = 11 : i64} {
  func.func @_pe_kernel(%arg0: i32, %arg1: memref<16x2x128xf32, #tpu.memory_space<vmem>>, %arg2: memref<16x1x128xf32, #tpu.memory_space<vmem>>, %arg3: memref<16x2x1xf32, #tpu.memory_space<vmem>>, %arg4: memref<16x2x128xf32, #tpu.memory_space<vmem>>) attributes {dimension_semantics = [#tpu.dimension_semantics<parallel>], iteration_bounds = array<i64: 1>, scalar_prefetch = 0 : i64, scratch_operands = 0 : i64, tpu.core_type = #tpu.core_type<tc>, window_params = [{transform_indices = @transform_0, window_bounds = array<i64: 16, 2, 128>}, {transform_indices = @transform_1, window_bounds = array<i64: 16, 1, 128>}, {transform_indices = @transform_2, window_bounds = array<i64: 16, 2, 1>}, {transform_indices = @transform_3, window_bounds = array<i64: 16, 2, 128>}]} {
    %c0 = arith.constant 0 : index
    %c0_0 = arith.constant 0 : index
    %c0_1 = arith.constant 0 : index
    %0 = vector.load %arg1[%c0, %c0_0, %c0_1] : memref<16x2x128xf32, #tpu.memory_space<vmem>>, vector<16x2x128xf32>
    %c0_2 = arith.constant 0 : index
    %c0_3 = arith.constant 0 : index
    %c0_4 = arith.constant 0 : index
    %1 = vector.load %arg2[%c0_2, %c0_3, %c0_4] : memref<16x1x128xf32, #tpu.memory_space<vmem>>, vector<16x1x128xf32>
    %c0_5 = arith.constant 0 : index
    %c0_6 = arith.constant 0 : index
    %c0_7 = arith.constant 0 : index
    %2 = vector.load %arg3[%c0_5, %c0_6, %c0_7] : memref<16x2x1xf32, #tpu.memory_space<vmem>>, vector<16x2x1xf32>
    %3 = vector.broadcast %1 : vector<16x1x128xf32> to vector<16x2x128xf32>
    %4 = vector.broadcast %2 : vector<16x2x1xf32> to vector<16x2x128xf32>
    %5 = arith.mulf %3, %4 : vector<16x2x128xf32>
    %6 = arith.addf %0, %5 : vector<16x2x128xf32>
    %c0_8 = arith.constant 0 : index
    %c0_9 = arith.constant 0 : index
    %c0_10 = arith.constant 0 : index
    %7 = vector.load %arg4[%c0_8, %c0_9, %c0_10] : memref<16x2x128xf32, #tpu.memory_space<vmem>>, vector<16x2x128xf32>
    tpu.vector_store %arg4[%c0_8, %c0_9, %c0_10], %6 {strides = array<i32>} : memref<16x2x128xf32, #tpu.memory_space<vmem>>, vector<16x2x128xf32>,
    return
  }
  func.func @transform_0(%arg0: i32) -> (i32, i32, i32) {
    %c0_i32 = arith.constant 0 : i32
    %c0_i32_0 = arith.constant 0 : i32
    %c0_i32_1 = arith.constant 0 : i32
    return %arg0, %c0_i32, %c0_i32_0 : i32, i32, i32
  }
  func.func @transform_1(%arg0: i32) -> (i32, i32, i32) {
    %c0_i32 = arith.constant 0 : i32
    %c0_i32_0 = arith.constant 0 : i32
    %c0_i32_1 = arith.constant 0 : i32
    return %arg0, %c0_i32, %c0_i32_0 : i32, i32, i32
  }
  func.func @transform_2(%arg0: i32) -> (i32, i32, i32) {
    %c0_i32 = arith.constant 0 : i32
    %c0_i32_0 = arith.constant 0 : i32
    %c0_i32_1 = arith.constant 0 : i32
    return %arg0, %c0_i32, %c0_i32_0 : i32, i32, i32
  }
  func.func @transform_3(%arg0: i32) -> (i32, i32, i32) {
    %c0_i32 = arith.constant 0 : i32
    %c0_i32_0 = arith.constant 0 : i32
    %c0_i32_1 = arith.constant 0 : i32
    return %arg0, %c0_i32, %c0_i32_0 : i32, i32, i32
  }
}

</mosaic_0001>

<llo_original>
// kernel: tpu_custom_call.1
$region0: #{tpu_custom_call.1}
  #allocation0 [shape = 'u32[]', space=smem, size = 0x4, offset = 0x4, fixed_abs, tag = 'smem constant byte address 0x4 - core index']
  #allocation1 [shape = 'u32[72,128]{1,0:T(1,128)}', space=vmem, size = 0x9000, scoped, tag = 'internal scratch']
  %s0 = inlined_call_operand.hbm [shape: f32[16,2,128], index: 0, kind: input, shape index: {}, may-alias: {0,3}]
  %s1 = inlined_call_operand.vmem [shape: f32[64,1,128], index: 1, kind: input, shape index: {}]
  %s2 = inlined_call_operand.vmem [shape: f32[16,2,1], index: 2, kind: input, shape index: {}]
  %s3 = inlined_call_operand.hbm [shape: f32[16,2,128], index: 3, kind: output, shape index: {}, may-alias: {0,3}]
  %s4 = sld [smem:[#allocation0]]
  $region26: #{tpu_custom_call.1} parent=0
    _
  %s6 = ssub.s32 1, %s4
  %s7 = scalar_select 0, %s6, %s4
  $region1: #{tpu_custom_call.1} parent=0
    #allocation2 [shape = 'u8[16384]{0}', space=vmem, size = 0x4000, scoped, tag = 'input window, operand 0, single buffered']
    #allocation3 [shape = 's32[1]{0}', space=sflag, size = 0x4, scoped, tag = 'scoped memory for tpu_custom_call.1']
    #allocation4 [shape = 's32[1]{0}', space=sflag, size = 0x4, scoped, tag = 'scoped memory for tpu_custom_call.1']
    #allocation5 [shape = 'u8[16384]{0}', space=vmem, size = 0x4000, scoped, tag = 'output window, operand 0, single buffered']
    %8 = vsyncpa [#allocation3], 0
    %9 = vsyncpa [#allocation4], 0
    // Predicated region
    $region2: #{tpu_custom_call.1} parent=1 // pred_check
      _
    $region3: #{tpu_custom_call.1} parent=1 // pred_check_branch
      %11 = sbr.rel (0) target = $region5
    $region4: #{tpu_custom_call.1} parent=1 // pred_region
      %13 = vsyncadd [#allocation3], 0
      %s14 = sshll.u32 %s0, 4
      %s15 = int_to_ptr.hbm [resolvable:$true] %s14
      %s16 = sshll.u32 [#allocation2], 4
      %s17 = int_to_ptr.vmem [resolvable:$true] %s16
      %22 = dma.hbm_to_vmem [thread:$0]  %s15, 512, %s17, [#allocation3], 32, 32, 2
    $region5: #{tpu_custom_call.1} parent=1 // pred_fallthru
      _
    // Predicated region
    $region6: #{tpu_custom_call.1} parent=1 // pred_check
      _
    $region7: #{tpu_custom_call.1} parent=1 // pred_check_branch
      %24 = sbr.rel (0) target = $region9
    $region8: #{tpu_custom_call.1} parent=1 // pred_region
      _
    $region9: #{tpu_custom_call.1} parent=1 // pred_fallthru
      _
    // Predicated region
    $region10: #{tpu_custom_call.1} parent=1 // pred_check
      _
    $region11: #{tpu_custom_call.1} parent=1 // pred_check_branch
      %26 = sbr.rel (0) target = $region13
    $region12: #{tpu_custom_call.1} parent=1 // pred_region
      _
    $region13: #{tpu_custom_call.1} parent=1 // pred_fallthru
      _
    // Predicated region
    $region14: #{tpu_custom_call.1} parent=1 // pred_check
      _
    $region15: #{tpu_custom_call.1} parent=1 // pred_check_branch
      %28 = sbr.rel (0) target = $region17
    $region16: #{tpu_custom_call.1} parent=1 // pred_region
      %30 = dma.done [#allocation3], 512
    $region17: #{tpu_custom_call.1} parent=1 // pred_fallthru
      _
    %v31 = vld [vmem:[#allocation2] sm:$0x3]
    %v32 = vld [vmem:[#allocation2 + $0x2] sm:$0x3]
    %v33 = vld [vmem:[#allocation2 + $0x4] sm:$0x3]
    %v34 = vld [vmem:[#allocation2 + $0x6] sm:$0x3]
    %v35 = vld [vmem:[#allocation2 + $0x8] sm:$0x3]
    %v36 = vld [vmem:[#allocation2 + $0xa] sm:$0x3]
    %v37 = vld [vmem:[#allocation2 + $0xc] sm:$0x3]
    %v38 = vld [vmem:[#allocation2 + $0xe] sm:$0x3]
    %v39 = vld [vmem:[#allocation2 + $0x10] sm:$0x3]
    %v40 = vld [vmem:[#allocation2 + $0x12] sm:$0x3]
    %v41 = vld [vmem:[#allocation2 + $0x14] sm:$0x3]
    %v42 = vld [vmem:[#allocation2 + $0x16] sm:$0x3]
    %v43 = vld [vmem:[#allocation2 + $0x18] sm:$0x3]
    %v44 = vld [vmem:[#allocation2 + $0x1a] sm:$0x3]
    %v45 = vld [vmem:[#allocation2 + $0x1c] sm:$0x3]
    %v46 = vld [vmem:[#allocation2 + $0x1e] sm:$0x3]
    %v47 = vld [vmem:[%s1] sm:$0x1]
    %v48 = vld [vmem:[%s1 + $0x1] sm:$0x1]
    %v49 = vld [vmem:[%s1 + $0x2] sm:$0x1]
    %v50 = vld [vmem:[%s1 + $0x3] sm:$0x1]
    %v51 = vld [vmem:[%s1 + $0x4] sm:$0x1]
    %v52 = vld [vmem:[%s1 + $0x5] sm:$0x1]
    %v53 = vld [vmem:[%s1 + $0x6] sm:$0x1]
    %v54 = vld [vmem:[%s1 + $0x7] sm:$0x1]
    %v55 = vld [vmem:[%s1 + $0x8] sm:$0x1]
    %v56 = vld [vmem:[%s1 + $0x9] sm:$0x1]
    %v57 = vld [vmem:[%s1 + $0xa] sm:$0x1]
    %v58 = vld [vmem:[%s1 + $0xb] sm:$0x1]
    %v59 = vld [vmem:[%s1 + $0xc] sm:$0x1]
    %v60 = vld [vmem:[%s1 + $0xd] sm:$0x1]
    %v61 = vld [vmem:[%s1 + $0xe] sm:$0x1]
    %v62 = vld [vmem:[%s1 + $0xf] sm:$0x1]
    %v63 = vld [vmem:[%s2] sm:$0x3]
    %v64 = vld [vmem:[%s2 + $0x2] sm:$0x3]
    %v65 = vld [vmem:[%s2 + $0x4] sm:$0x3]
    %v66 = vld [vmem:[%s2 + $0x6] sm:$0x3]
    %v67 = vld [vmem:[%s2 + $0x8] sm:$0x3]
    %v68 = vld [vmem:[%s2 + $0xa] sm:$0x3]
    %v69 = vld [vmem:[%s2 + $0xc] sm:$0x3]
    %v70 = vld [vmem:[%s2 + $0xe] sm:$0x3]
    %v71 = vld [vmem:[%s2 + $0x10] sm:$0x3]
    %v72 = vld [vmem:[%s2 + $0x12] sm:$0x3]
    %v73 = vld [vmem:[%s2 + $0x14] sm:$0x3]
    %v74 = vld [vmem:[%s2 + $0x16] sm:$0x3]
    %v75 = vld [vmem:[%s2 + $0x18] sm:$0x3]
    %v76 = vld [vmem:[%s2 + $0x1a] sm:$0x3]
    %v77 = vld [vmem:[%s2 + $0x1c] sm:$0x3]
    %v78 = vld [vmem:[%s2 + $0x1e] sm:$0x3]
    %v95 = vperm.slane %v47, 0
    %v96 = vperm.slane %v48, 0
    %v97 = vperm.slane %v49, 0
    %v98 = vperm.slane %v50, 0
    %v99 = vperm.slane %v51, 0
    %v100 = vperm.slane %v52, 0
    %v101 = vperm.slane %v53, 0
    %v102 = vperm.slane %v54, 0
    %v103 = vperm.slane %v55, 0
    %v104 = vperm.slane %v56, 0
    %v105 = vperm.slane %v57, 0
    %v106 = vperm.slane %v58, 0
    %v107 = vperm.slane %v59, 0
    %v108 = vperm.slane %v60, 0
    %v109 = vperm.slane %v61, 0
    %v110 = vperm.slane %v62, 0
    %128 = vset.pattern.permute.xlu0 0
    %129 = vperm.xlu0 %128, %v63
    %v130 = vpop.permute.xlu0 %129
    %133 = vset.pattern.permute.xlu0 0
    %134 = vperm.xlu0 %133, %v64
    %v135 = vpop.permute.xlu0 %134
    %138 = vset.pattern.permute.xlu0 0
    %139 = vperm.xlu0 %138, %v65
    %v140 = vpop.permute.xlu0 %139
    %143 = vset.pattern.permute.xlu0 0
    %144 = vperm.xlu0 %143, %v66
    %v145 = vpop.permute.xlu0 %144
    %148 = vset.pattern.permute.xlu0 0
    %149 = vperm.xlu0 %148, %v67
    %v150 = vpop.permute.xlu0 %149
    %153 = vset.pattern.permute.xlu0 0
    %154 = vperm.xlu0 %153, %v68
    %v155 = vpop.permute.xlu0 %154
    %158 = vset.pattern.permute.xlu0 0
    %159 = vperm.xlu0 %158, %v69
    %v160 = vpop.permute.xlu0 %159
    %163 = vset.pattern.permute.xlu0 0
    %164 = vperm.xlu0 %163, %v70
    %v165 = vpop.permute.xlu0 %164
    %168 = vset.pattern.permute.xlu0 0
    %169 = vperm.xlu0 %168, %v71
    %v170 = vpop.permute.xlu0 %169
    %173 = vset.pattern.permute.xlu0 0
    %174 = vperm.xlu0 %173, %v72
    %v175 = vpop.permute.xlu0 %174
    %178 = vset.pattern.permute.xlu0 0
    %179 = vperm.xlu0 %178, %v73
    %v180 = vpop.permute.xlu0 %179
    %183 = vset.pattern.permute.xlu0 0
    %184 = vperm.xlu0 %183, %v74
    %v185 = vpop.permute.xlu0 %184
    %188 = vset.pattern.permute.xlu0 0
    %189 = vperm.xlu0 %188, %v75
    %v190 = vpop.permute.xlu0 %189
    %193 = vset.pattern.permute.xlu0 0
    %194 = vperm.xlu0 %193, %v76
    %v195 = vpop.permute.xlu0 %194
    %198 = vset.pattern.permute.xlu0 0
    %199 = vperm.xlu0 %198, %v77
    %v200 = vpop.permute.xlu0 %199
    %203 = vset.pattern.permute.xlu0 0
    %204 = vperm.xlu0 %203, %v78
    %v205 = vpop.permute.xlu0 %204
    %v207 = vmul.f32 %v95, %v130
    %v208 = vmul.f32 %v96, %v135
    %v209 = vmul.f32 %v97, %v140
    %v210 = vmul.f32 %v98, %v145
    %v211 = vmul.f32 %v99, %v150
    %v212 = vmul.f32 %v100, %v155
    %v213 = vmul.f32 %v101, %v160
    %v214 = vmul.f32 %v102, %v165
    %v215 = vmul.f32 %v103, %v170
    %v216 = vmul.f32 %v104, %v175
    %v217 = vmul.f32 %v105, %v180
    %v218 = vmul.f32 %v106, %v185
    %v219 = vmul.f32 %v107, %v190
    %v220 = vmul.f32 %v108, %v195
    %v221 = vmul.f32 %v109, %v200
    %v222 = vmul.f32 %v110, %v205
    %v223 = vadd.f32 %v31, %v207
    %v224 = vadd.f32 %v32, %v208
    %v225 = vadd.f32 %v33, %v209
    %v226 = vadd.f32 %v34, %v210
    %v227 = vadd.f32 %v35, %v211
    %v228 = vadd.f32 %v36, %v212
    %v229 = vadd.f32 %v37, %v213
    %v230 = vadd.f32 %v38, %v214
    %v231 = vadd.f32 %v39, %v215
    %v232 = vadd.f32 %v40, %v216
    %v233 = vadd.f32 %v41, %v217
    %v234 = vadd.f32 %v42, %v218
    %v235 = vadd.f32 %v43, %v219
    %v236 = vadd.f32 %v44, %v220
    %v237 = vadd.f32 %v45, %v221
    %v238 = vadd.f32 %v46, %v222
    %239 = vst [vmem:[#allocation5] sm:$0x3] %v223
    %240 = vst [vmem:[#allocation5 + $0x2] sm:$0x3] %v224
    %241 = vst [vmem:[#allocation5 + $0x4] sm:$0x3] %v225
    %242 = vst [vmem:[#allocation5 + $0x6] sm:$0x3] %v226
    %243 = vst [vmem:[#allocation5 + $0x8] sm:$0x3] %v227
    %244 = vst [vmem:[#allocation5 + $0xa] sm:$0x3] %v228
    %245 = vst [vmem:[#allocation5 + $0xc] sm:$0x3] %v229
    %246 = vst [vmem:[#allocation5 + $0xe] sm:$0x3] %v230
    %247 = vst [vmem:[#allocation5 + $0x10] sm:$0x3] %v231
    %248 = vst [vmem:[#allocation5 + $0x12] sm:$0x3] %v232
    %249 = vst [vmem:[#allocation5 + $0x14] sm:$0x3] %v233
    %250 = vst [vmem:[#allocation5 + $0x16] sm:$0x3] %v234
    %251 = vst [vmem:[#allocation5 + $0x18] sm:$0x3] %v235
    %252 = vst [vmem:[#allocation5 + $0x1a] sm:$0x3] %v236
    %253 = vst [vmem:[#allocation5 + $0x1c] sm:$0x3] %v237
    %254 = vst [vmem:[#allocation5 + $0x1e] sm:$0x3] %v238
    // Predicated region
    $region18: #{tpu_custom_call.1} parent=1 // pred_check
      _
    $region19: #{tpu_custom_call.1} parent=1 // pred_check_branch
      %256 = sbr.rel (0) target = $region21
    $region20: #{tpu_custom_call.1} parent=1 // pred_region
      %258 = vsyncadd [#allocation4], 0
      %s259 = sshll.u32 [#allocation5], 4
      %s260 = int_to_ptr.vmem [resolvable:$true] %s259
      %s261 = sshll.u32 %s3, 4
      %s262 = int_to_ptr.hbm [resolvable:$true] %s261
      %267 = dma.vmem_to_hbm [thread:$0]  %s260, 512, %s262, [#allocation4], 32, 32, 2
    $region21: #{tpu_custom_call.1} parent=1 // pred_fallthru
      _
    // Predicated region
    $region22: #{tpu_custom_call.1} parent=1 // pred_check
      _
    $region23: #{tpu_custom_call.1} parent=1 // pred_check_branch
      %269 = sbr.rel (0) target = $region25
    $region24: #{tpu_custom_call.1} parent=1 // pred_region
      %271 = dma.done [#allocation4], 512
    $region25: #{tpu_custom_call.1} parent=1 // pred_fallthru
      _
    %272 = vsyncpa [#allocation3], 1
    %273 = vsyncpa [#allocation4], 1

</llo_original>
